<compile_context>
chip_gen: v7x
topology: tpu7x:2x2x1
jax: 0.10.0
libtpu: 0.0.40
codegen_flags: <defaults>
</compile_context>

<pallas_src>
import math
from functools import partial

import jax
import jax.numpy as jnp
from jax.experimental import pallas as pl
from jax.experimental.pallas import tpu as pltpu


def _round_up(x, m):
    return (x + m - 1) // m * m


def _cdiv(a, b):
    return -(-a // b)


_INV_SQRT2 = 1.0 / math.sqrt(2.0)
_SQRT_2_OVER_PI = math.sqrt(2.0 / math.pi)


def _gelu(h, approximate):
    if approximate:
        # tanh-approx GELU: the transcendental routes to the EUP (separate VLIW
        # slot), freeing the VALU — worth enabling on v5e.  Small numeric
        # deviation vs torch's exact-erf GELU.
        return 0.5 * h * (1.0 + jnp.tanh(_SQRT_2_OVER_PI * (h + 0.044715 * h * h * h)))
    # exact GELU (erf form) == torch.nn.GELU default
    return 0.5 * h * (1.0 + jax.lax.erf(h * jnp.float32(_INV_SQRT2)))


def _vmem_capacity_bytes():
    try:
        info = pltpu.get_tpu_info()
        cap = getattr(info, "vmem_capacity_bytes", None)
        if cap:
            return int(cap)
    except Exception:
        pass
    return 64 * 1024 * 1024  # conservative default: v7x per-TensorCore VMEM


def _pick_hidden_tile(H, th):
    """Largest multiple-of-128 divisor of H that is <= th (else the smallest)."""
    divisors = [d for d in range(128, H + 1, 128) if H % d == 0]
    under = [d for d in divisors if d <= th]
    return max(under) if under else min(divisors)


def prepare_ffn_params(w1, b1, w2, b2, *, weight_dtype=jnp.bfloat16):
    """One-time conversion from torch nn.Linear layout (out, in) to the kernel's
    row-major layout + cast of the weight matrices to the MXU-native dtype.
    Call at model load, not per forward pass."""
    return (jnp.transpose(w1).astype(weight_dtype),   # (D, H)
            b1.reshape(1, -1).astype(jnp.float32),    # (1, H)
            jnp.transpose(w2).astype(weight_dtype),   # (H, D)
            b2.reshape(1, -1).astype(jnp.float32))    # (1, D)


# ---------------------------------------------------------------------------
# Kernels
# ---------------------------------------------------------------------------

def _ffn_resident_kernel(x_ref, w1_ref, b1_ref, w2_ref, b2_ref, o_ref, *,
                         approximate_gelu):
    # W1/W2 are VMEM-resident (constant index_map): fetched once, reused by
    # every row tile.  Both dots run at the weights' native (bf16) dtype with
    # f32 accumulation.
    h = jnp.dot(x_ref[...].astype(w1_ref.dtype), w1_ref[...],
                preferred_element_type=jnp.float32)
    h = _gelu(h + b1_ref[...].astype(jnp.float32), approximate_gelu)
    # dropout(p=0.0) == identity at inference.
    y = jnp.dot(h.astype(w2_ref.dtype), w2_ref[...],
                preferred_element_type=jnp.float32)
    o_ref[...] = (y + b2_ref[...].astype(jnp.float32)).astype(o_ref.dtype)


def _ffn_hidden_tiled_kernel(x_ref, w1_ref, b1_ref, w2_ref, b2_ref, o_ref,
                             acc_ref, *, approximate_gelu):
    # Fallback when W1/W2 do not fit VMEM: hidden dim tiled on an inner
    # "arbitrary" grid axis with an f32 accumulator.
    j = pl.program_id(1)

    @pl.when(j == 0)
    def _():
        acc_ref[...] = jnp.zeros_like(acc_ref)

    h = jnp.dot(x_ref[...].astype(w1_ref.dtype), w1_ref[...],
                preferred_element_type=jnp.float32)
    h = _gelu(h + b1_ref[...].astype(jnp.float32), approximate_gelu)
    acc_ref[...] += jnp.dot(h.astype(w2_ref.dtype), w2_ref[...],
                            preferred_element_type=jnp.float32)

    @pl.when(j == pl.num_programs(1) - 1)
    def _():
        o_ref[...] = (acc_ref[...] + b2_ref[...].astype(jnp.float32)
                      ).astype(o_ref.dtype)


# ---------------------------------------------------------------------------
# Wrapper
# ---------------------------------------------------------------------------

def feed_forward(x, w1_t, b1, w2_t, b2, *, tm=256, th=512,
                 approximate_gelu=False, force_hidden_tiling=False):
    """x: (batch, seq, dim); w1_t: (dim, hidden); b1: (1, hidden);
    w2_t: (hidden, dim); b2: (1, dim).  Weights typically bf16 (see
    prepare_ffn_params); biases f32; output keeps x.dtype."""
    B, S, D = x.shape
    H = w1_t.shape[1]
    M = B * S
    out_dtype = x.dtype

    # VMEM budget derived from the actual chip (v5e/v6e 128 MiB, v7x 64 MiB).
    vmem_cap = _vmem_capacity_bytes()
    vmem_limit = min(int(0.75 * vmem_cap), 96 * 1024 * 1024)
    resident_budget = min(int(0.60 * vmem_cap), 80 * 1024 * 1024)

    # Row tile: multiple of 16 (bf16 sublane packing); sized so >=2 row tiles
    # exist when M allows it (keeps both v7x TensorCores busy on the
    # "parallel" axis).  M is zero-padded to the tile, not asserted.
    tm_eff = min(tm, max(16, _round_up(_cdiv(M, 2), 16)))
    M_pad = _round_up(M, tm_eff)
    n_rows = M_pad // tm_eff

    x2 = x.reshape(M, D).astype(w1_t.dtype)   # stream x at the MXU dtype
    if M_pad != M:
        x2 = jnp.pad(x2, ((0, M_pad - M), (0, 0)))

    wb = jnp.dtype(w1_t.dtype).itemsize
    xb = jnp.dtype(x2.dtype).itemsize
    ob = jnp.dtype(out_dtype).itemsize
    # Conservative: assume Pallas double-buffers every blocked input/output.
    resident_est = (2 * (D * H + H * D) * wb           # W1^T + W2^T buffers
                    + 2 * tm_eff * D * (xb + ob)       # x / out row tiles
                    + tm_eff * H * 4)                  # f32 hidden intermediate

    if (not force_hidden_tiling) and resident_est <= resident_budget:
        # ---- resident-weights path: weights fetched once, no accumulator ----
        out = pl.pallas_call(
            partial(_ffn_resident_kernel, approximate_gelu=approximate_gelu),
            out_shape=jax.ShapeDtypeStruct((M_pad, D), out_dtype),
            grid_spec=pltpu.PrefetchScalarGridSpec(
                num_scalar_prefetch=0,
                grid=(n_rows,),
                in_specs=[
                    pl.BlockSpec((tm_eff, D), lambda i: (i, 0)),   # x row tile
                    pl.BlockSpec((D, H), lambda i: (0, 0)),        # W1^T resident
                    pl.BlockSpec((1, H), lambda i: (0, 0)),        # b1
                    pl.BlockSpec((H, D), lambda i: (0, 0)),        # W2^T resident
                    pl.BlockSpec((1, D), lambda i: (0, 0)),        # b2
                ],
                out_specs=pl.BlockSpec((tm_eff, D), lambda i: (i, 0)),
            ),
            compiler_params=pltpu.CompilerParams(
                dimension_semantics=("parallel",),
                vmem_limit_bytes=vmem_limit),
        )(x2, w1_t, b1, w2_t, b2)
    else:
        # ---- hidden-tiled fallback ------------------------------------------
        # Ensure H is a multiple of 128 (zero-pad: padded hidden units
        # contribute GELU(0 + 0) = 0 through zero W2 rows -> exact).
        H_pad = _round_up(H, 128)
        if H_pad != H:
            w1_t = jnp.pad(w1_t, ((0, 0), (0, H_pad - H)))
            b1 = jnp.pad(b1, ((0, 0), (0, H_pad - H)))
            w2_t = jnp.pad(w2_t, ((0, H_pad - H), (0, 0)))
        th_eff = _pick_hidden_tile(H_pad, th)
        n_h = H_pad // th_eff

        out = pl.pallas_call(
            partial(_ffn_hidden_tiled_kernel, approximate_gelu=approximate_gelu),
            out_shape=jax.ShapeDtypeStruct((M_pad, D), out_dtype),
            grid_spec=pltpu.PrefetchScalarGridSpec(
                num_scalar_prefetch=0,
                grid=(n_rows, n_h),                    # rows parallel, hidden inner
                in_specs=[
                    pl.BlockSpec((tm_eff, D), lambda i, j: (i, 0)),   # x row tile
                    # TODO(synk): if per-step weight DMA shows up exposed at
                    # small tm, deepen with pipeline_mode=pl.Buffered(3).
                    pl.BlockSpec((D, th_eff), lambda i, j: (0, j)),   # W1^T slice
                    pl.BlockSpec((1, th_eff), lambda i, j: (0, j)),   # b1 slice
                    pl.BlockSpec((th_eff, D), lambda i, j: (j, 0)),   # W2^T slice
                    pl.BlockSpec((1, D), lambda i, j: (0, 0)),        # b2
                ],
                out_specs=pl.BlockSpec((tm_eff, D), lambda i, j: (i, 0)),
                scratch_shapes=[pltpu.VMEM((tm_eff, D), jnp.float32)],
            ),
            compiler_params=pltpu.CompilerParams(
                dimension_semantics=("parallel", "arbitrary"),
                vmem_limit_bytes=vmem_limit),
        )(x2, w1_t, b1, w2_t, b2)

    if M_pad != M:
        out = out[:M]
    return out.reshape(B, S, D)


# ---------------------------------------------------------------------------
# Reference + demo
# ---------------------------------------------------------------------------

def _reference(x, w1, b1, w2, b2):
    hp = jax.lax.Precision.HIGHEST
    h = jnp.dot(x.reshape(-1, x.shape[-1]), w1.T, precision=hp) + b1
    h = 0.5 * h * (1.0 + jax.lax.erf(h / jnp.sqrt(2.0)))
    y = jnp.dot(h, w2.T, precision=hp) + b2
    return y.reshape(x.shape)


if __name__ == "__main__":
    key = jax.random.PRNGKey(0)

    def make_params(dim, mult, k):
        hidden = dim * mult
        k_w1, k_b1, k_w2, k_b2 = jax.random.split(k, 4)
        bound1 = 1.0 / math.sqrt(dim)
        w1 = jax.random.uniform(k_w1, (hidden, dim), jnp.float32, -bound1, bound1)
        b1 = jax.random.uniform(k_b1, (hidden,), jnp.float32, -bound1, bound1)
        bound2 = 1.0 / math.sqrt(hidden)
        w2 = jax.random.uniform(k_w2, (dim, hidden), jnp.float32, -bound2, bound2)
        b2 = jax.random.uniform(k_b2, (dim,), jnp.float32, -bound2, bound2)
        return w1, b1, w2, b2

    k_x1, k_p1, k_x2, k_p2 = jax.random.split(key, 4)

    # --- test 1: resident-weights path (batch=2, seq=8, dim=32, mult=4) -----
    batch, seq, dim, mult = 2, 8, 32, 4
    x = jax.random.normal(k_x1, (batch, seq, dim), dtype=jnp.float32)
    w1, b1, w2, b2 = make_params(dim, mult, k_p1)
    params = prepare_ffn_params(w1, b1, w2, b2)          # one-time, bf16 weights
    y = feed_forward(x, *params)
    jax.block_until_ready(y)
    y_ref = _reference(x, w1, b1, w2, b2)
    # bf16 matmul path -> loosened tolerance vs the f32 torch-style reference
    assert jnp.allclose(y, y_ref, atol=2e-2, rtol=2e-2), "mismatch (resident path)"

    # --- test 2: hidden-tiled fallback + ragged-row padding ------------------
    batch, seq, dim, mult = 2, 7, 64, 4        # hidden=256 -> two 128-wide steps
    x_t = jax.random.normal(k_x2, (batch, seq, dim), dtype=jnp.float32)
    w1, b1, w2, b2 = make_params(dim, mult, k_p2)
    params = prepare_ffn_params(w1, b1, w2, b2)
    y_t = feed_forward(x_t, *params, th=128, force_hidden_tiling=True)
    jax.block_until_ready(y_t)
    y_t_ref = _reference(x_t, w1, b1, w2, b2)
    assert jnp.allclose(y_t, y_t_ref, atol=2e-2, rtol=2e-2), "mismatch (tiled path)"

    print("KERNEL_OK")
</pallas_src>

<mosaic_0001>
module attributes {stable_mosaic.version = 11 : i64} {
  func.func @_ffn_resident_kernel(%arg0: i32, %arg1: memref<16x32xbf16, #tpu.memory_space<vmem>>, %arg2: memref<32x128xbf16, #tpu.memory_space<vmem>>, %arg3: memref<1x128xf32, #tpu.memory_space<vmem>>, %arg4: memref<128x32xbf16, #tpu.memory_space<vmem>>, %arg5: memref<1x32xf32, #tpu.memory_space<vmem>>, %arg6: memref<16x32xf32, #tpu.memory_space<vmem>>) attributes {dimension_semantics = [#tpu.dimension_semantics<parallel>], iteration_bounds = array<i64: 1>, scalar_prefetch = 0 : i64, scratch_operands = 0 : i64, tpu.core_type = #tpu.core_type<tc>, window_params = [{transform_indices = @transform_0, window_bounds = array<i64: 16, 32>}, {pipeline_mode = #tpu.pipeline_mode<synchronous>, transform_indices = @transform_1, window_bounds = array<i64: 32, 128>}, {pipeline_mode = #tpu.pipeline_mode<synchronous>, transform_indices = @transform_2, window_bounds = array<i64: 1, 128>}, {pipeline_mode = #tpu.pipeline_mode<synchronous>, transform_indices = @transform_3, window_bounds = array<i64: 128, 32>}, {pipeline_mode = #tpu.pipeline_mode<synchronous>, transform_indices = @transform_4, window_bounds = array<i64: 1, 32>}, {transform_indices = @transform_5, window_bounds = array<i64: 16, 32>}]} {
    %c0 = arith.constant 0 : index
    %c0_0 = arith.constant 0 : index
    %0 = vector.load %arg1[%c0, %c0_0] : memref<16x32xbf16, #tpu.memory_space<vmem>>, vector<16x32xbf16>
    %c0_1 = arith.constant 0 : index
    %c0_2 = arith.constant 0 : index
    %1 = vector.load %arg2[%c0_1, %c0_2] : memref<32x128xbf16, #tpu.memory_space<vmem>>, vector<32x128xbf16>
    %cst = arith.constant dense<0.000000e+00> : vector<16x128xf32>
    %2 = tpu.matmul %0, %1, %cst {dimension_numbers = #tpu.dot_dimension_numbers<[1], [0], [0], [1], [0, 0, 1, 1], [], []>} : vector<16x32xbf16>, vector<32x128xbf16>, vector<16x128xf32> -> vector<16x128xf32>
    %c0_3 = arith.constant 0 : index
    %c0_4 = arith.constant 0 : index
    %3 = vector.load %arg3[%c0_3, %c0_4] : memref<1x128xf32, #tpu.memory_space<vmem>>, vector<1x128xf32>
    %4 = vector.broadcast %3 : vector<1x128xf32> to vector<16x128xf32>
    %5 = arith.addf %2, %4 : vector<16x128xf32>
    %cst_5 = arith.constant 5.000000e-01 : f32
    %6 = vector.broadcast %cst_5 : f32 to vector<16x128xf32>
    %7 = arith.mulf %6, %5 : vector<16x128xf32>
    %cst_6 = arith.constant 0.707106769 : f32
    %8 = vector.broadcast %cst_6 : f32 to vector<16x128xf32>
    %9 = arith.mulf %5, %8 : vector<16x128xf32>
    %10 = math.erf %9 : vector<16x128xf32>
    %cst_7 = arith.constant 1.000000e+00 : f32
    %11 = vector.broadcast %cst_7 : f32 to vector<16x128xf32>
    %12 = arith.addf %11, %10 : vector<16x128xf32>
    %13 = arith.mulf %7, %12 : vector<16x128xf32>
    %14 = arith.truncf %13 : vector<16x128xf32> to vector<16x128xbf16>
    %c0_8 = arith.constant 0 : index
    %c0_9 = arith.constant 0 : index
    %15 = vector.load %arg4[%c0_8, %c0_9] : memref<128x32xbf16, #tpu.memory_space<vmem>>, vector<128x32xbf16>
    %cst_10 = arith.constant dense<0.000000e+00> : vector<16x32xf32>
    %16 = tpu.matmul %14, %15, %cst_10 {dimension_numbers = #tpu.dot_dimension_numbers<[1], [0], [0], [1], [0, 0, 1, 1], [], []>} : vector<16x128xbf16>, vector<128x32xbf16>, vector<16x32xf32> -> vector<16x32xf32>
    %c0_11 = arith.constant 0 : index
    %c0_12 = arith.constant 0 : index
    %17 = vector.load %arg5[%c0_11, %c0_12] : memref<1x32xf32, #tpu.memory_space<vmem>>, vector<1x32xf32>
    %18 = vector.broadcast %17 : vector<1x32xf32> to vector<16x32xf32>
    %19 = arith.addf %16, %18 : vector<16x32xf32>
    %c0_13 = arith.constant 0 : index
    %c0_14 = arith.constant 0 : index
    %20 = vector.load %arg6[%c0_13, %c0_14] : memref<16x32xf32, #tpu.memory_space<vmem>>, vector<16x32xf32>
    tpu.vector_store %arg6[%c0_13, %c0_14], %19 {strides = array<i32>} : memref<16x32xf32, #tpu.memory_space<vmem>>, vector<16x32xf32>,
    return
  }
  func.func @transform_0(%arg0: i32) -> (i32, i32) {
    %c0_i32 = arith.constant 0 : i32
    %c0_i32_0 = arith.constant 0 : i32
    return %arg0, %c0_i32 : i32, i32
  }
  func.func @transform_1(%arg0: i32) -> (i32, i32) {
    %c0_i32 = arith.constant 0 : i32
    %c0_i32_0 = arith.constant 0 : i32
    %c0_i32_1 = arith.constant 0 : i32
    return %c0_i32, %c0_i32_0 : i32, i32
  }
  func.func @transform_2(%arg0: i32) -> (i32, i32) {
    %c0_i32 = arith.constant 0 : i32
    %c0_i32_0 = arith.constant 0 : i32
    %c0_i32_1 = arith.constant 0 : i32
    return %c0_i32, %c0_i32_0 : i32, i32
  }
  func.func @transform_3(%arg0: i32) -> (i32, i32) {
    %c0_i32 = arith.constant 0 : i32
    %c0_i32_0 = arith.constant 0 : i32
    %c0_i32_1 = arith.constant 0 : i32
    return %c0_i32, %c0_i32_0 : i32, i32
  }
  func.func @transform_4(%arg0: i32) -> (i32, i32) {
    %c0_i32 = arith.constant 0 : i32
    %c0_i32_0 = arith.constant 0 : i32
    %c0_i32_1 = arith.constant 0 : i32
    return %c0_i32, %c0_i32_0 : i32, i32
  }
  func.func @transform_5(%arg0: i32) -> (i32, i32) {
    %c0_i32 = arith.constant 0 : i32
    %c0_i32_0 = arith.constant 0 : i32
    return %arg0, %c0_i32 : i32, i32
  }
}

</mosaic_0001>

<llo_original>
// kernel: tpu_custom_call.1
$region0: #{tpu_custom_call.1}
  #allocation0 [shape = 'u32[]', space=smem, size = 0x4, offset = 0x4, fixed_abs, tag = 'smem constant byte address 0x4 - core index']
  #allocation1 [shape = 'u32[144,128]{1,0:T(1,128)}', space=vmem, size = 0x12000, scoped, tag = 'internal scratch']
  %s0 = inlined_call_operand.vmem [shape: bf16[16,32], index: 0, kind: input, shape index: {}]
  %s1 = inlined_call_operand.vmem [shape: bf16[32,128], index: 1, kind: input, shape index: {}]
  %s2 = inlined_call_operand.vmem [shape: f32[1,128], index: 2, kind: input, shape index: {}]
  %s3 = inlined_call_operand.vmem [shape: bf16[128,32], index: 3, kind: input, shape index: {}]
  %s4 = inlined_call_operand.vmem [shape: f32[1,32], index: 4, kind: input, shape index: {}]
  %s5 = inlined_call_operand.hbm [shape: f32[16,32], index: 5, kind: output, shape index: {}]
  %s6 = sld [smem:[#allocation0]]
  $region30: #{tpu_custom_call.1} parent=0
    _
  %s8 = ssub.s32 1, %s6
  %s9 = scalar_select 0, %s8, %s6
  $region1: #{tpu_custom_call.1} parent=0
    #allocation2 [shape = 'u8[8192]{0}', space=vmem, size = 0x2000, scoped, tag = 'output window, operand 0, single buffered']
    #allocation3 [shape = 's32[1]{0}', space=sflag, size = 0x4, scoped, tag = 'scoped memory for tpu_custom_call.1']
    %10 = vsyncpa [#allocation3], 0
    // Predicated region
    $region2: #{tpu_custom_call.1} parent=1 // pred_check
      _
    $region3: #{tpu_custom_call.1} parent=1 // pred_check_branch
      %12 = sbr.rel (0) target = $region5
    $region4: #{tpu_custom_call.1} parent=1 // pred_region
      _
    $region5: #{tpu_custom_call.1} parent=1 // pred_fallthru
      _
    // Predicated region
    $region6: #{tpu_custom_call.1} parent=1 // pred_check
      _
    $region7: #{tpu_custom_call.1} parent=1 // pred_check_branch
      %14 = sbr.rel (0) target = $region9
    $region8: #{tpu_custom_call.1} parent=1 // pred_region
      _
    $region9: #{tpu_custom_call.1} parent=1 // pred_fallthru
      _
    // Predicated region
    $region10: #{tpu_custom_call.1} parent=1 // pred_check
      _
    $region11: #{tpu_custom_call.1} parent=1 // pred_check_branch
      %16 = sbr.rel (0) target = $region13
    $region12: #{tpu_custom_call.1} parent=1 // pred_region
      _
    $region13: #{tpu_custom_call.1} parent=1 // pred_fallthru
      _
    // Predicated region
    $region14: #{tpu_custom_call.1} parent=1 // pred_check
      _
    $region15: #{tpu_custom_call.1} parent=1 // pred_check_branch
      %18 = sbr.rel (0) target = $region17
    $region16: #{tpu_custom_call.1} parent=1 // pred_region
      _
    $region17: #{tpu_custom_call.1} parent=1 // pred_fallthru
      _
    // Predicated region
    $region18: #{tpu_custom_call.1} parent=1 // pred_check
      _
    $region19: #{tpu_custom_call.1} parent=1 // pred_check_branch
      %20 = sbr.rel (0) target = $region21
    $region20: #{tpu_custom_call.1} parent=1 // pred_region
      _
    $region21: #{tpu_custom_call.1} parent=1 // pred_fallthru
      _
    %v22 = vld [vmem:[%s0] sm:$0xf]
    %v23 = vld [vmem:[%s0 + $0x4] sm:$0xf]
    %v24 = vld [vmem:[%s1] sm:$0xf]
    %v25 = vld [vmem:[%s1 + $0x4] sm:$0xf]
    %v26 = vld [vmem:[%s1 + $0x8] sm:$0xf]
    %v27 = vld [vmem:[%s1 + $0xc] sm:$0xf]
    %v28 = vld [vmem:[%s2] sm:$0x1]
    %v30 = vlaneseq
    %v31 = vshrl.u32 %v30, 7
    %v32 = vsub.s32 0, %v31
    %v33 = vrot.slane %v28, %v32
    %v37 = vunpack.c.l.b16 %v22
    %v38 = vunpack.c.l.b16 %v23
    %v39 = vpack.c.b16 %v38, %v37
    %v44 = vunpack.c.l.b16 %v24
    %v45 = vunpack.c.l.b16 %v25
    %v46 = vunpack.c.l.b16 %v26
    %v47 = vunpack.c.l.b16 %v27
    %v48 = vpack.c.b16 %v45, %v44
    %v49 = vpack.c.b16 %v47, %v46
    %vm52 = vcmask 261120
    %v54 = vsel %vm52, %v39, 0
    %56 = vmatprep.subr.bf16.mxu0 0
    %57 = vmatpush1.bf16.msra.mxu0 %v48
    %58 = vmatprep.subr.bf16.mxu0 0
    %59 = vmatpush1.bf16.msra.mxu0 %v49
    %60 = vmatprep.subr.bf16.mxu0 0
    %61 = vmatpush1.bf16.msra.mxu0 0
    %62 = vmatprep.subr.bf16.mxu0 0
    %63 = vmatpush1.bf16.msra.mxu0 0
    %64 = vmatprep.subr.bf16.mxu0 0
    %65 = vmatpush1.bf16.msra.mxu0 0
    %66 = vmatprep.subr.bf16.mxu0 0
    %67 = vmatpush1.bf16.msra.mxu0 0
    %68 = vmatprep.subr.bf16.mxu0 0
    %69 = vmatpush1.bf16.msra.mxu0 0
    %70 = vmatprep.subr.bf16.mxu0 0
    %71 = vmatpush1.bf16.msra.mxu0 0
    %72 = vmatprep.subr.bf16.mxu0 0
    %73 = vmatpush1.bf16.msra.mxu0 0
    %74 = vmatprep.subr.bf16.mxu0 0
    %75 = vmatpush1.bf16.msra.mxu0 0
    %76 = vmatprep.subr.bf16.mxu0 0
    %77 = vmatpush1.bf16.msra.mxu0 0
    %78 = vmatprep.subr.bf16.mxu0 0
    %79 = vmatpush1.bf16.msra.mxu0 0
    %80 = vmatprep.subr.bf16.mxu0 0
    %81 = vmatpush1.bf16.msra.mxu0 0
    %82 = vmatprep.subr.bf16.mxu0 0
    %83 = vmatpush1.bf16.msra.mxu0 0
    %84 = vmatprep.subr.bf16.mxu0 0
    %85 = vmatpush1.bf16.msra.mxu0 0
    %86 = vmatprep.subr.bf16.mxu0 0
    %87 = vmatpush1.bf16.msra.mxu0 0
    %88 = vmatprep.mubr.bf16.mxu0 0
    %89 = vmatmul.mubr.bf16.gmra.mrb[0].mxu0 %v54
    %v90 = vpop.f32.mrb[0].mxu0
    %v91 = vadd.f32 %v33, %v90
    %v92 = vpop.f32.mrb[0].mxu0
    %v93 = vpop.f32.mrb[0].mxu0
    %v94 = vadd.f32 %v33, %v93
    %v95 = vpop.f32.mrb[0].mxu0
    %96 = vdwg.mxu0
    %v97 = vmul.f32 %v91, 0.5
    %v98 = vmul.f32 %v94, 0.5
    %v99 = vmul.f32 %v91, 0.70710677
    %v100 = vmul.f32 %v94, 0.70710677
    %v101 = verf.f32.pop %v99
    %v102 = verf.f32.pop %v100
    %v103 = vadd.f32 %v101, 1.0
    %v104 = vadd.f32 %v102, 1.0
    %v105 = vmul.f32 %v97, %v103
    %v106 = vmul.f32 %v98, %v104
    %v107 = vpack.c.bf16 %v106, %v105
    %v108 = vld [vmem:[%s3] sm:$0xf]
    %v109 = vld [vmem:[%s3 + $0x4] sm:$0xf]
    %v110 = vld [vmem:[%s3 + $0x8] sm:$0xf]
    %v111 = vld [vmem:[%s3 + $0xc] sm:$0xf]
    %v112 = vld [vmem:[%s3 + $0x10] sm:$0xf]
    %v113 = vld [vmem:[%s3 + $0x14] sm:$0xf]
    %v114 = vld [vmem:[%s3 + $0x18] sm:$0xf]
    %v115 = vld [vmem:[%s3 + $0x1c] sm:$0xf]
    %v116 = vld [vmem:[%s3 + $0x20] sm:$0xf]
    %v117 = vld [vmem:[%s3 + $0x24] sm:$0xf]
    %v118 = vld [vmem:[%s3 + $0x28] sm:$0xf]
    %v119 = vld [vmem:[%s3 + $0x2c] sm:$0xf]
    %v120 = vld [vmem:[%s3 + $0x30] sm:$0xf]
    %v121 = vld [vmem:[%s3 + $0x34] sm:$0xf]
    %v122 = vld [vmem:[%s3 + $0x38] sm:$0xf]
    %v123 = vld [vmem:[%s3 + $0x3c] sm:$0xf]
    %v124 = vld [vmem:[%s4] sm:$0x1]
    %v126 = vlaneseq
    %v127 = vshrl.u32 %v126, 7
    %v128 = vsub.s32 0, %v127
    %v129 = vrot.slane %v124, %v128
    %v147 = vunpack.c.l.b16 %v108
    %v148 = vunpack.c.l.b16 %v109
    %v149 = vunpack.c.l.b16 %v110
    %v150 = vunpack.c.l.b16 %v111
    %v151 = vunpack.c.l.b16 %v112
    %v152 = vunpack.c.l.b16 %v113
    %v153 = vunpack.c.l.b16 %v114
    %v154 = vunpack.c.l.b16 %v115
    %v155 = vunpack.c.l.b16 %v116
    %v156 = vunpack.c.l.b16 %v117
    %v157 = vunpack.c.l.b16 %v118
    %v158 = vunpack.c.l.b16 %v119
    %v159 = vunpack.c.l.b16 %v120
    %v160 = vunpack.c.l.b16 %v121
    %v161 = vunpack.c.l.b16 %v122
    %v162 = vunpack.c.l.b16 %v123
    %v163 = vpack.c.b16 %v148, %v147
    %v164 = vpack.c.b16 %v150, %v149
    %v165 = vpack.c.b16 %v152, %v151
    %v166 = vpack.c.b16 %v154, %v153
    %v167 = vpack.c.b16 %v156, %v155
    %v168 = vpack.c.b16 %v158, %v157
    %v169 = vpack.c.b16 %v160, %v159
    %v170 = vpack.c.b16 %v162, %v161
    %179 = vmatprep.subr.bf16.mxu0 0
    %180 = vmatpush1.bf16.msra.mxu0 %v163
    %181 = vmatprep.subr.bf16.mxu0 0
    %182 = vmatpush1.bf16.msra.mxu0 %v164
    %183 = vmatprep.subr.bf16.mxu0 0
    %184 = vmatpush1.bf16.msra.mxu0 %v165
    %185 = vmatprep.subr.bf16.mxu0 0
    %186 = vmatpush1.bf16.msra.mxu0 %v166
    %187 = vmatprep.subr.bf16.mxu0 0
    %188 = vmatpush1.bf16.msra.mxu0 %v167
    %189 = vmatprep.subr.bf16.mxu0 0
    %190 = vmatpush1.bf16.msra.mxu0 %v168
    %191 = vmatprep.subr.bf16.mxu0 0
    %192 = vmatpush1.bf16.msra.mxu0 %v169
    %193 = vmatprep.subr.bf16.mxu0 0
    %194 = vmatpush1.bf16.msra.mxu0 %v170
    %195 = vmatprep.subr.bf16.mxu0 0
    %196 = vmatpush1.bf16.msra.mxu0 0
    %197 = vmatprep.subr.bf16.mxu0 0
    %198 = vmatpush1.bf16.msra.mxu0 0
    %199 = vmatprep.subr.bf16.mxu0 0
    %200 = vmatpush1.bf16.msra.mxu0 0
    %201 = vmatprep.subr.bf16.mxu0 0
    %202 = vmatpush1.bf16.msra.mxu0 0
    %203 = vmatprep.subr.bf16.mxu0 0
    %204 = vmatpush1.bf16.msra.mxu0 0
    %205 = vmatprep.subr.bf16.mxu0 0
    %206 = vmatpush1.bf16.msra.mxu0 0
    %207 = vmatprep.subr.bf16.mxu0 0
    %208 = vmatpush1.bf16.msra.mxu0 0
    %209 = vmatprep.subr.bf16.mxu0 0
    %210 = vmatpush1.bf16.msra.mxu0 0
    %211 = vmatprep.mubr.bf16.mxu0 0
    %212 = vmatmul.mubr.bf16.gmra.mrb[0].mxu0 %v107
    %v213 = vpop.f32.mrb[0].mxu0
    %v214 = vadd.f32 %v129, %v213
    %v215 = vpop.f32.mrb[0].mxu0
    %v216 = vpop.f32.mrb[0].mxu0
    %v217 = vadd.f32 %v129, %v216
    %v218 = vpop.f32.mrb[0].mxu0
    %219 = vdwg.mxu0
    %220 = vst.msk [vmem:[#allocation2] sm:$0xff] %vm52, %v214
    %221 = vst.msk [vmem:[#allocation2 + $0x8] sm:$0xff] %vm52, %v217
    // Predicated region
    $region22: #{tpu_custom_call.1} parent=1 // pred_check
      _
    $region23: #{tpu_custom_call.1} parent=1 // pred_check_branch
      %223 = sbr.rel (0) target = $region25
    $region24: #{tpu_custom_call.1} parent=1 // pred_region
      %s225 = ssub.s32 256, 256
      %226 = vsyncadd [#allocation3], %s225
      %s227 = sshll.u32 [#allocation2], 4
      %s228 = int_to_ptr.vmem [resolvable:$true] %s227
      %233 = dma.vmem_to_hbm [thread:$0]  %s228, 256, %s5, [#allocation3], 128, 128, 8
    $region25: #{tpu_custom_call.1} parent=1 // pred_fallthru
      _
    // Predicated region
    $region26: #{tpu_custom_call.1} parent=1 // pred_check
      _
    $region27: #{tpu_custom_call.1} parent=1 // pred_check_branch
      %235 = sbr.rel (0) target = $region29
    $region28: #{tpu_custom_call.1} parent=1 // pred_region
      %236 = dma.done [#allocation3], 256
    $region29: #{tpu_custom_call.1} parent=1 // pred_fallthru
      _
    %237 = vsyncpa [#allocation3], 1

</llo_original>
